<compile_context>
chip_gen: v7x
topology: tpu7x:2x2x1
jax: 0.10.0
libtpu: 0.0.40
codegen_flags: <defaults>
</compile_context>

<pallas_src>
import functools

import jax
import jax.numpy as jnp
from jax.experimental import pallas as pl
from jax.experimental.pallas import tpu as pltpu

# Folded tail constants: v7 = 0.7978845608028654*(0.5*v1 + 0.044715*v1^3) = v1*(C1 + C2*v1*v1)
_C1 = 0.7978845608028654 * 0.5
_C2 = 0.7978845608028654 * 0.044715


def _fused_linear_gelu_kernel(x_ref, wb_ref, o_ref, *, batch, in_features):
    """x_ref: SMEM (B, K) f32; wb_ref: VMEM (K+1, N) f32 (rows 0..K-1 = W^T, row K = bias);
    o_ref: VMEM (B, N) f32.

    K is tiny (3), so the linear layer is computed as K unrolled scalar-splat FMAs on the
    VPU instead of a padded MXU pass (which would be pure systolic fill/drain latency).
    """
    for bi in range(batch):                      # B is tiny and static -> full unroll
        v1 = wb_ref[in_features:in_features + 1, :]          # bias row, (1, N) vld
        for k in range(in_features):                          # K = 3 -> 3 VPU FMAs
            v1 = v1 + x_ref[bi, k] * wb_ref[k:k + 1, :]       # per-row ref vld, scalar splat
        # fused GELU-tanh-style tail:  out = v1 * (1 + tanh(v1*(C1 + C2*v1*v1)))
        t = v1 * (_C1 + _C2 * v1 * v1)
        o_ref[bi:bi + 1, :] = v1 * (1.0 + jnp.tanh(t))


def make_fused_linear_gelu(weight, bias):
    """Pre-pack PyTorch-layout Linear params (weight: (N, K), bias: (N,)) once at init time.

    Returns a jitted callable taking only x of shape (B, K).
    """
    N, K = weight.shape
    # One-time packing (init-time, not per-call): (K+1, N) with output features on the lane axis.
    wb = jnp.concatenate([jnp.asarray(weight).T,
                          jnp.asarray(bias).reshape(1, N)], axis=0).astype(jnp.float32)

    def apply(x):
        B = x.shape[0]
        kernel = functools.partial(_fused_linear_gelu_kernel, batch=B, in_features=K)
        return pl.pallas_call(
            kernel,
            out_shape=jax.ShapeDtypeStruct((B, N), jnp.float32),
            in_specs=[
                pl.BlockSpec(memory_space=pltpu.MemorySpace.SMEM),   # x: scalar-indexed reads
                pl.BlockSpec(memory_space=pltpu.MemorySpace.VMEM),   # packed [W^T; bias]
            ],
            out_specs=pl.BlockSpec(memory_space=pltpu.MemorySpace.VMEM),
        )(x, wb)

    return jax.jit(apply)


def reference_jax(x, weight, bias):
    # Mirrors the original module's forward (with v3 := v1 and pow(., 3)).
    v1 = x @ weight.T + bias
    v2 = v1 * 0.5
    v4 = v1 ** 3
    v5 = v4 * 0.044715
    v6 = v2 + v5
    v7 = v6 * 0.7978845608028654
    v8 = jnp.tanh(v7)
    v9 = v8 + 1.0
    return v1 * v9


if __name__ == "__main__":
    key = jax.random.PRNGKey(0)
    kx, kw, kb = jax.random.split(key, 3)

    # Input matching torch.randn(1, 3)
    x1 = jax.random.normal(kx, (1, 3), dtype=jnp.float32)

    # Deterministic Linear(3, 16) parameters (Kaiming-uniform-style bound like PyTorch)
    bound = 1.0 / jnp.sqrt(3.0)
    weight = jax.random.uniform(kw, (16, 3), minval=-bound, maxval=bound, dtype=jnp.float32)
    bias = jax.random.uniform(kb, (16,), minval=-bound, maxval=bound, dtype=jnp.float32)

    fused_linear_gelu = make_fused_linear_gelu(weight, bias)   # params packed once here

    out = jax.block_until_ready(fused_linear_gelu(x1))
    ref = reference_jax(x1, weight, bias)

    assert out.shape == (1, 16), out.shape
    assert jnp.allclose(out, ref, atol=1e-5, rtol=1e-5), (out, ref)

    print("KERNEL_OK")
</pallas_src>

<mosaic_0001>
module attributes {stable_mosaic.version = 11 : i64} {
  func.func @_fused_linear_gelu_kernel(%arg0: memref<1x3xf32, #tpu.memory_space<smem>>, %arg1: memref<4x16xf32, #tpu.memory_space<vmem>>, %arg2: memref<1x16xf32, #tpu.memory_space<vmem>>) attributes {dimension_semantics = [], scalar_prefetch = 0 : i64, scratch_operands = 0 : i64, tpu.core_type = #tpu.core_type<tc>} {
    %c3 = arith.constant 3 : index
    %c0 = arith.constant 0 : index
    %0 = vector.load %arg1[%c3, %c0] : memref<4x16xf32, #tpu.memory_space<vmem>>, vector<1x16xf32>
    %c0_0 = arith.constant 0 : index
    %c0_1 = arith.constant 0 : index
    %1 = memref.load %arg0[%c0_0, %c0_1] : memref<1x3xf32, #tpu.memory_space<smem>>
    %c0_2 = arith.constant 0 : index
    %c0_3 = arith.constant 0 : index
    %2 = vector.load %arg1[%c0_2, %c0_3] : memref<4x16xf32, #tpu.memory_space<vmem>>, vector<1x16xf32>
    %3 = vector.broadcast %1 : f32 to vector<1x16xf32>
    %4 = arith.mulf %3, %2 : vector<1x16xf32>
    %5 = arith.addf %0, %4 : vector<1x16xf32>
    %c0_4 = arith.constant 0 : index
    %c1 = arith.constant 1 : index
    %6 = memref.load %arg0[%c0_4, %c1] : memref<1x3xf32, #tpu.memory_space<smem>>
    %c1_5 = arith.constant 1 : index
    %c0_6 = arith.constant 0 : index
    %7 = vector.load %arg1[%c1_5, %c0_6] : memref<4x16xf32, #tpu.memory_space<vmem>>, vector<1x16xf32>
    %8 = vector.broadcast %6 : f32 to vector<1x16xf32>
    %9 = arith.mulf %8, %7 : vector<1x16xf32>
    %10 = arith.addf %5, %9 : vector<1x16xf32>
    %c0_7 = arith.constant 0 : index
    %c2 = arith.constant 2 : index
    %11 = memref.load %arg0[%c0_7, %c2] : memref<1x3xf32, #tpu.memory_space<smem>>
    %c2_8 = arith.constant 2 : index
    %c0_9 = arith.constant 0 : index
    %12 = vector.load %arg1[%c2_8, %c0_9] : memref<4x16xf32, #tpu.memory_space<vmem>>, vector<1x16xf32>
    %13 = vector.broadcast %11 : f32 to vector<1x16xf32>
    %14 = arith.mulf %13, %12 : vector<1x16xf32>
    %15 = arith.addf %10, %14 : vector<1x16xf32>
    %cst = arith.constant 0.0356774069 : f32
    %16 = vector.broadcast %cst : f32 to vector<1x16xf32>
    %17 = arith.mulf %16, %15 : vector<1x16xf32>
    %18 = arith.mulf %17, %15 : vector<1x16xf32>
    %cst_10 = arith.constant 0.398942292 : f32
    %19 = vector.broadcast %cst_10 : f32 to vector<1x16xf32>
    %20 = arith.addf %19, %18 : vector<1x16xf32>
    %21 = arith.mulf %15, %20 : vector<1x16xf32>
    %22 = math.tanh %21 : vector<1x16xf32>
    %cst_11 = arith.constant 1.000000e+00 : f32
    %23 = vector.broadcast %cst_11 : f32 to vector<1x16xf32>
    %24 = arith.addf %23, %22 : vector<1x16xf32>
    %25 = arith.mulf %15, %24 : vector<1x16xf32>
    %c0_12 = arith.constant 0 : index
    %c0_13 = arith.constant 0 : index
    %26 = vector.load %arg2[%c0_12, %c0_13] : memref<1x16xf32, #tpu.memory_space<vmem>>, vector<1x16xf32>
    tpu.vector_store %arg2[%c0_12, %c0_13], %25 {strides = array<i32>} : memref<1x16xf32, #tpu.memory_space<vmem>>, vector<1x16xf32>,
    return
  }
}

</mosaic_0001>

<llo_original>
// kernel: apply.1
$region0: #{apply.1}
  #allocation0 [shape = 'u32[]', space=smem, size = 0x4, offset = 0x4, fixed_abs, tag = 'smem constant byte address 0x4 - core index']
  #allocation1 [shape = 'u32[144,128]{1,0:T(1,128)}', space=vmem, size = 0x12000, scoped, tag = 'internal scratch']
  %s0 = inlined_call_operand.hbm [shape: f32[1,3], index: 0, kind: input, shape index: {}]
  %s1 = inlined_call_operand.hbm [shape: f32[4,16], index: 1, kind: input, shape index: {}]
  %s2 = inlined_call_operand.hbm [shape: f32[1,16], index: 2, kind: output, shape index: {}]
  %s3 = sld [smem:[#allocation0]]
  $region26: #{apply.1} parent=0
    _
  %s5 = ssub.s32 1, %s3
  %s6 = scalar_select 0, %s5, %s3
  $region1: #{apply.1} parent=0
    #allocation2 [shape = 'u8[512]{0}', space=smem, size = 0x200, scoped, tag = 'input window, operand 0, single buffered']
    #allocation3 [shape = 's32[1]{0}', space=sflag, size = 0x4, scoped, tag = 'scoped memory for apply.1']
    #allocation4 [shape = 's32[1]{0}', space=sflag, size = 0x4, scoped, tag = 'scoped memory for apply.1']
    #allocation5 [shape = 's32[1]{0}', space=sflag, size = 0x4, scoped, tag = 'scoped memory for apply.1']
    #allocation6 [shape = 'u8[2048]{0}', space=vmem, size = 0x800, scoped, tag = 'input window, operand 1, single buffered']
    #allocation7 [shape = 'u8[512]{0}', space=vmem, size = 0x400, scoped, tag = 'output window, operand 0, single buffered']
    %7 = vsyncpa [#allocation5], 0
    %8 = vsyncpa [#allocation3], 0
    %9 = vsyncpa [#allocation4], 0
    // Predicated region
    $region2: #{apply.1} parent=1 // pred_check
      _
    $region3: #{apply.1} parent=1 // pred_check_branch
      %11 = sbr.rel (0) target = $region5
    $region4: #{apply.1} parent=1 // pred_region
      %s13 = ssub.s32 16, 16
      %14 = vsyncadd [#allocation5], %s13
      %17 = dma.hbm_to_smem %s0, 16, [#allocation2], [#allocation5]
    $region5: #{apply.1} parent=1 // pred_fallthru
      _
    // Predicated region
    $region6: #{apply.1} parent=1 // pred_check
      _
    $region7: #{apply.1} parent=1 // pred_check_branch
      %19 = sbr.rel (0) target = $region9
    $region8: #{apply.1} parent=1 // pred_region
      %s21 = ssub.s32 64, 64
      %22 = vsyncadd [#allocation3], %s21
      %s24 = sshll.u32 [#allocation6], 4
      %s25 = int_to_ptr.vmem [resolvable:$true] %s24
      %27 = dma.hbm_to_vmem [thread:$0]  %s1, 64, %s25, [#allocation3]
    $region9: #{apply.1} parent=1 // pred_fallthru
      _
    // Predicated region
    $region10: #{apply.1} parent=1 // pred_check
      _
    $region11: #{apply.1} parent=1 // pred_check_branch
      %29 = sbr.rel (0) target = $region13
    $region12: #{apply.1} parent=1 // pred_region
      %30 = dma.done [#allocation5], 16
    $region13: #{apply.1} parent=1 // pred_fallthru
      _
    // Predicated region
    $region14: #{apply.1} parent=1 // pred_check
      _
    $region15: #{apply.1} parent=1 // pred_check_branch
      %32 = sbr.rel (0) target = $region17
    $region16: #{apply.1} parent=1 // pred_region
      %33 = dma.done [#allocation3], 64
    $region17: #{apply.1} parent=1 // pred_fallthru
      _
    %34 = sfence
    %v35 = vld [vmem:[#allocation6 + $0x3] sm:$0x1]
    %s36 = sld [smem:[#allocation2]]
    %v37 = vld [vmem:[#allocation6] sm:$0x1]
    %v38 = vstv %s36
    %v39 = vmul.f32 %v38, %v37
    %v40 = vadd.f32 %v35, %v39
    %s41 = sld [smem:[#allocation2 + $0x1]]
    %v42 = vld [vmem:[#allocation6 + $0x1] sm:$0x1]
    %v43 = vstv %s41
    %v44 = vmul.f32 %v43, %v42
    %v45 = vadd.f32 %v40, %v44
    %s46 = sld [smem:[#allocation2 + $0x2]]
    %v47 = vld [vmem:[#allocation6 + $0x2] sm:$0x1]
    %v48 = vstv %s46
    %v49 = vmul.f32 %v48, %v47
    %v50 = vadd.f32 %v45, %v49
    %v51 = vmul.f32 %v50, 0.035677407
    %v52 = vmul.f32 %v51, %v50
    %v53 = vadd.f32 %v52, 0.3989423
    %v54 = vmul.f32 %v50, %v53
    %v55 = vtanh.pop %v54
    %v56 = vadd.f32 %v55, 1.0
    %v57 = vmul.f32 %v50, %v56
    %vm58 = vcmask 122880
    %59 = vst.msk [vmem:[#allocation7] sm:$0x1] %vm58, %v57
    // Predicated region
    $region18: #{apply.1} parent=1 // pred_check
      _
    $region19: #{apply.1} parent=1 // pred_check_branch
      %61 = sbr.rel (0) target = $region21
    $region20: #{apply.1} parent=1 // pred_region
      %s63 = ssub.s32 16, 16
      %64 = vsyncadd [#allocation4], %s63
      %s66 = sshll.u32 [#allocation7], 4
      %s67 = int_to_ptr.vmem [resolvable:$true] %s66
      %69 = dma.vmem_to_hbm [thread:$0]  %s67, 16, %s2, [#allocation4]
    $region21: #{apply.1} parent=1 // pred_fallthru
      _
    // Predicated region
    $region22: #{apply.1} parent=1 // pred_check
      _
    $region23: #{apply.1} parent=1 // pred_check_branch
      %71 = sbr.rel (0) target = $region25
    $region24: #{apply.1} parent=1 // pred_region
      %72 = dma.done [#allocation4], 16
    $region25: #{apply.1} parent=1 // pred_fallthru
      _
    %73 = vsyncpa [#allocation3], 1
    %74 = vsyncpa [#allocation4], 1
    %75 = vsyncpa [#allocation5], 1

</llo_original>
